<compile_context>
chip_gen: v7x
topology: tpu7x:2x2x1
jax: 0.10.0
libtpu: 0.0.40
codegen_flags: <defaults>
</compile_context>

<pallas_src>
import functools

import jax
import jax.numpy as jnp
from jax.experimental import pallas as pl
from jax.experimental.pallas import tpu as pltpu


def _fused_kernel(lhs_ref, wA_ref, w4_ref, out_ref):
    # lhs_ref : (Kp, tm)        im2col columns (row K is the all-ones bias row)
    # wA_ref  : (3*Cout, Kp)    stage-1 weight, BN scale folded; column K = BN shift
    # w4_ref  : (Cout, 3*Cout)  stage-2 1x1 conv weight
    # out_ref : (Cout, tm)
    h = jnp.dot(wA_ref[...], lhs_ref[...], preferred_element_type=jnp.float32)
    h = jnp.maximum(h, 0.2 * h)                 # LeakyReLU(0.2): mul + max
    out_ref[...] = jnp.dot(w4_ref[...], h, preferred_element_type=jnp.float32)


@functools.partial(jax.jit, static_argnames=("tm",))
def multi_t2_forward(x_nchw, w0_oihw, w2_oihw, w3_oihw, w4_oihw,
                     bn_scales, bn_shifts, tm=8192):
    """x_nchw: (N, Cin, H, W) float32 -> (N, Cout, H, W) float32."""
    N, Cin, H, W = x_nchw.shape
    Cout = w0_oihw.shape[0]
    HW = H * W
    K = 5 * Cin
    # Pad the contraction dim to a sublane multiple, guaranteeing >=1 spare row
    # for the bias (handles the K % 8 == 0 case too).
    Kp = ((K + 1 + 7) // 8) * 8

    # ---- stage-1 weight (3*Cout, Kp): three conv branches + folded BN ----------
    # taps k map to input offset (k - 2):
    #   branch 0 (1x1, pad 0): tap k = 2
    #   branch 2 (1x3, pad 1): taps k = j + 1, j = 0..2
    #   branch 3 (1x5, pad 2): taps k = j,     j = 0..4
    wA = jnp.zeros((5, Cin, 3 * Cout), jnp.float32)
    wA = wA.at[2, :, 0:Cout].set(
        jnp.transpose(w0_oihw[:, :, 0, 0]) * bn_scales[0])
    for j in range(3):
        wA = wA.at[j + 1, :, Cout:2 * Cout].set(
            jnp.transpose(w2_oihw[:, :, 0, j]) * bn_scales[1])
    for j in range(5):
        wA = wA.at[j, :, 2 * Cout:3 * Cout].set(
            jnp.transpose(w3_oihw[:, :, 0, j]) * bn_scales[2])
    wA_t = jnp.zeros((3 * Cout, Kp), jnp.float32)
    wA_t = wA_t.at[:, :K].set(jnp.transpose(wA.reshape(K, 3 * Cout)))
    wA_t = wA_t.at[:, K].set(bn_shifts.reshape(-1))   # BN shift rides in the matmul
    w4_t = w4_oihw[:, :, 0, 0]                        # (Cout, 3*Cout)

    # ---- per-image transposed im2col: (N, Kp, HW_pad) --------------------------
    x_pad = jnp.pad(x_nchw, ((0, 0), (0, 0), (0, 0), (2, 2)))           # (N,Cin,H,W+4)
    taps = jnp.stack([x_pad[:, :, :, k:k + W] for k in range(5)], axis=1)  # (N,5,Cin,H,W)
    lhs = taps.reshape(N, K, HW)                                        # row = k*Cin+cin
    ones_row = jnp.ones((N, 1, HW), jnp.float32)                        # bias row
    pad_rows = jnp.zeros((N, Kp - K - 1, HW), jnp.float32)
    lhs = jnp.concatenate([lhs, ones_row, pad_rows], axis=1)            # (N, Kp, HW)

    # ---- column tiling: lane-dense tiles (multiple of 128) ---------------------
    tm_eff = max(128, min(tm, ((HW + 127) // 128) * 128))
    grid_hw = -(-HW // tm_eff)
    HW_pad = grid_hw * tm_eff
    lhs = jnp.pad(lhs, ((0, 0), (0, 0), (0, HW_pad - HW)))

    out = pl.pallas_call(
        _fused_kernel,
        out_shape=jax.ShapeDtypeStruct((N, Cout, HW_pad), jnp.float32),
        grid_spec=pltpu.PrefetchScalarGridSpec(
            num_scalar_prefetch=0,
            grid=(N, grid_hw),
            in_specs=[
                pl.BlockSpec((None, Kp, tm_eff), lambda n, i: (n, 0, i)),
                pl.BlockSpec((3 * Cout, Kp), lambda n, i: (0, 0)),
                pl.BlockSpec((Cout, 3 * Cout), lambda n, i: (0, 0)),
            ],
            out_specs=pl.BlockSpec((None, Cout, tm_eff), lambda n, i: (n, 0, i)),
        ),
        compiler_params=pltpu.CompilerParams(
            dimension_semantics=("parallel", "parallel"),
            vmem_limit_bytes=48 * 1024 * 1024),
    )(lhs, wA_t, w4_t)

    # (N, Cout, HW_pad) -> NCHW via slice + reshape only (no transpose).
    return out[:, :, :HW].reshape(N, Cout, H, W)


def _reference_forward(x, w0, w2, w3, w4, bn_scales, bn_shifts):
    """Pure-JAX reference with lax.conv (PyTorch NCHW/OIHW cross-correlation)."""
    def conv(inp, w, pad_w):
        return jax.lax.conv_general_dilated(
            inp, w, window_strides=(1, 1),
            padding=((0, 0), (pad_w, pad_w)),
            dimension_numbers=("NCHW", "OIHW", "NCHW"))

    def bn(y, i):
        s = bn_scales[i][None, :, None, None]
        b = bn_shifts[i][None, :, None, None]
        return y * s + b

    y0 = bn(conv(x, w0, 0), 0)
    y2 = bn(conv(x, w2, 1), 1)
    y3 = bn(conv(x, w3, 2), 2)
    cat = jnp.concatenate([y0, y2, y3], axis=1)
    act = jnp.where(cat > 0, cat, 0.2 * cat)
    return conv(act, w4, 0)


if __name__ == "__main__":
    # Small, forward-consistent shapes: NCHW input, Cin=3 (module default), Cout=64.
    N, Cin, H, W = 2, 3, 8, 32
    Cout = 64

    key = jax.random.PRNGKey(0)
    keys = jax.random.split(key, 9)

    x = jax.random.normal(keys[0], (N, Cin, H, W), jnp.float32)

    # Conv weights (OIHW, no bias), deterministic init.
    w0 = 0.1 * jax.random.normal(keys[1], (Cout, Cin, 1, 1), jnp.float32)
    w2 = 0.1 * jax.random.normal(keys[2], (Cout, Cin, 1, 3), jnp.float32)
    w3 = 0.1 * jax.random.normal(keys[3], (Cout, Cin, 1, 5), jnp.float32)
    w4 = 0.1 * jax.random.normal(keys[4], (Cout, 3 * Cout, 1, 1), jnp.float32)

    # BatchNorm (eval mode) params, folded into per-channel scale/shift.
    eps = 1e-5
    gammas = 1.0 + 0.1 * jax.random.normal(keys[5], (3, Cout), jnp.float32)
    betas = 0.1 * jax.random.normal(keys[6], (3, Cout), jnp.float32)
    means = 0.1 * jax.random.normal(keys[7], (3, Cout), jnp.float32)
    variances = 1.0 + 0.5 * jax.random.uniform(keys[8], (3, Cout), jnp.float32)
    bn_scales = gammas / jnp.sqrt(variances + eps)        # (3, Cout)
    bn_shifts = betas - means * bn_scales                 # (3, Cout)

    # tm=128 -> grid (N=2, HW-tiles=2) at this small size: exercises both grid dims.
    out = multi_t2_forward(x, w0, w2, w3, w4, bn_scales, bn_shifts, tm=128)
    out = jax.block_until_ready(out)

    ref = _reference_forward(x, w0, w2, w3, w4, bn_scales, bn_shifts)
    ref = jax.block_until_ready(ref)

    max_err = float(jnp.max(jnp.abs(out - ref)))
    assert out.shape == (N, Cout, H, W), out.shape
    assert max_err < 1e-3, f"mismatch vs reference: max_err={max_err}"

    print("KERNEL_OK")
</pallas_src>

<mosaic_0001>
module attributes {stable_mosaic.version = 11 : i64} {
  func.func @_fused_kernel(%arg0: i32, %arg1: i32, %arg2: memref<1x16x128xf32, #tpu.memory_space<vmem>>, %arg3: memref<192x16xf32, #tpu.memory_space<vmem>>, %arg4: memref<64x192xf32, #tpu.memory_space<vmem>>, %arg5: memref<1x64x128xf32, #tpu.memory_space<vmem>>) attributes {dimension_semantics = [#tpu.dimension_semantics<parallel>, #tpu.dimension_semantics<parallel>], iteration_bounds = array<i64: 2, 2>, scalar_prefetch = 0 : i64, scratch_operands = 0 : i64, tpu.core_type = #tpu.core_type<tc>, window_params = [{transform_indices = @transform_0, window_bounds = array<i64: 1, 16, 128>}, {pipeline_mode = #tpu.pipeline_mode<synchronous>, transform_indices = @transform_1, window_bounds = array<i64: 192, 16>}, {pipeline_mode = #tpu.pipeline_mode<synchronous>, transform_indices = @transform_2, window_bounds = array<i64: 64, 192>}, {transform_indices = @transform_3, window_bounds = array<i64: 1, 64, 128>}]} {
    %c0 = arith.constant 0 : index
    %c0_0 = arith.constant 0 : index
    %0 = vector.load %arg3[%c0, %c0_0] : memref<192x16xf32, #tpu.memory_space<vmem>>, vector<192x16xf32>
    %c0_1 = arith.constant 0 : index
    %c0_2 = arith.constant 0 : index
    %c0_3 = arith.constant 0 : index
    %1 = vector.load %arg2[%c0_1, %c0_2, %c0_3] : memref<1x16x128xf32, #tpu.memory_space<vmem>>, vector<1x16x128xf32>
    %2 = vector.shape_cast %1 : vector<1x16x128xf32> to vector<16x128xf32>
    %cst = arith.constant dense<0.000000e+00> : vector<192x128xf32>
    %3 = tpu.matmul %0, %2, %cst {dimension_numbers = #tpu.dot_dimension_numbers<[1], [0], [0], [1], [0, 0, 1, 1], [], []>} : vector<192x16xf32>, vector<16x128xf32>, vector<192x128xf32> -> vector<192x128xf32>
    %cst_4 = arith.constant 2.000000e-01 : f32
    %4 = vector.broadcast %cst_4 : f32 to vector<192x128xf32>
    %5 = arith.mulf %4, %3 : vector<192x128xf32>
    %6 = arith.maximumf %3, %5 : vector<192x128xf32>
    %c0_5 = arith.constant 0 : index
    %c0_6 = arith.constant 0 : index
    %7 = vector.load %arg4[%c0_5, %c0_6] : memref<64x192xf32, #tpu.memory_space<vmem>>, vector<64x192xf32>
    %cst_7 = arith.constant dense<0.000000e+00> : vector<64x128xf32>
    %8 = tpu.matmul %7, %6, %cst_7 {dimension_numbers = #tpu.dot_dimension_numbers<[1], [0], [0], [1], [0, 0, 1, 1], [], []>} : vector<64x192xf32>, vector<192x128xf32>, vector<64x128xf32> -> vector<64x128xf32>
    %c0_8 = arith.constant 0 : index
    %c0_9 = arith.constant 0 : index
    %c0_10 = arith.constant 0 : index
    %9 = vector.load %arg5[%c0_8, %c0_9, %c0_10] : memref<1x64x128xf32, #tpu.memory_space<vmem>>, vector<1x64x128xf32>
    %10 = vector.shape_cast %9 : vector<1x64x128xf32> to vector<64x128xf32>
    %11 = vector.shape_cast %8 : vector<64x128xf32> to vector<1x64x128xf32>
    tpu.vector_store %arg5[%c0_8, %c0_9, %c0_10], %11 {strides = array<i32>} : memref<1x64x128xf32, #tpu.memory_space<vmem>>, vector<1x64x128xf32>,
    return
  }
  func.func @transform_0(%arg0: i32, %arg1: i32) -> (i32, i32, i32) {
    %c0_i32 = arith.constant 0 : i32
    %c0_i32_0 = arith.constant 0 : i32
    return %arg0, %c0_i32, %arg1 : i32, i32, i32
  }
  func.func @transform_1(%arg0: i32, %arg1: i32) -> (i32, i32) {
    %c0_i32 = arith.constant 0 : i32
    %c0_i32_0 = arith.constant 0 : i32
    %c0_i32_1 = arith.constant 0 : i32
    return %c0_i32, %c0_i32_0 : i32, i32
  }
  func.func @transform_2(%arg0: i32, %arg1: i32) -> (i32, i32) {
    %c0_i32 = arith.constant 0 : i32
    %c0_i32_0 = arith.constant 0 : i32
    %c0_i32_1 = arith.constant 0 : i32
    return %c0_i32, %c0_i32_0 : i32, i32
  }
  func.func @transform_3(%arg0: i32, %arg1: i32) -> (i32, i32, i32) {
    %c0_i32 = arith.constant 0 : i32
    %c0_i32_0 = arith.constant 0 : i32
    return %arg0, %c0_i32, %arg1 : i32, i32, i32
  }
}

</mosaic_0001>

<llo_original>
// kernel: multi_t2_forward.1
$region0: #{multi_t2_forward.1}
  #allocation0 [shape = 'u32[]', space=smem, size = 0x4, offset = 0x4, fixed_abs, tag = 'smem constant byte address 0x4 - core index']
  #allocation1 [shape = 'u32[144,128]{1,0:T(1,128)}', space=vmem, size = 0x12000, scoped, tag = 'internal scratch']
  %s0 = inlined_call_operand.vmem [shape: f32[2,16,256], index: 0, kind: input, shape index: {}]
  %s1 = inlined_call_operand.vmem [shape: f32[192,16], index: 1, kind: input, shape index: {}]
  %s2 = inlined_call_operand.vmem [shape: f32[64,192], index: 2, kind: input, shape index: {}]
  %s3 = inlined_call_operand.vmem [shape: f32[2,64,256], index: 3, kind: output, shape index: {}]
  %s4 = sld [smem:[#allocation0]]
  $region117: #{multi_t2_forward.1} parent=0
    _
  %s6 = ssub.s32 1, %s4
  %s7 = scalar_select 0, %s6, %s4
  $region1: #{multi_t2_forward.1} parent=0
    #allocation2 [shape = 'u8[16384]{0}', space=vmem, size = 0x4000, scoped, tag = 'input window, operand 0']
    #allocation3 [shape = 'u8[65536]{0}', space=vmem, size = 0x10000, scoped, tag = 'output window, operand 0']
    loop: start=0, step=1, limit=6
    $region2: #{multi_t2_forward.1} parent=1 // loop_pre_header
      _
    $region3: #{multi_t2_forward.1} parent=1 // loop_header
      %s9 = sphi 0, %s13
      %p10 = scmp.ge.s32.totalorder %s9, 6
      %s16 = sphi 0, %s28
      %s17 = sphi 0, %s24
      %s18 = sphi 0, %s16
      %s19 = sphi 0, %s17
      %s20 = sphi 0, %s18
      %s21 = sphi 0, %s19
      %s33 = sphi 0, %s35
      %s36 = sphi 0, %s33
      %s37 = sphi 0, %s36
      %s53 = sphi 0, %s37
      %s57 = sphi 0, %s57
      %s59 = sphi 0, %s57
      %s60 = sphi 0, %s59
      %s74 = sphi 0, %s60
      %s78 = sphi 0, %s78
      %s80 = sphi 0, %s78
      %s81 = sphi 0, %s80
      %s95 = sphi 0, %s81
      %s103 = sphi 0, %s105
      %s106 = sphi 0, %s103
      %s107 = sphi 0, %s106
      %s123 = sphi 0, %s107
    $region4: #{multi_t2_forward.1} parent=1 // loop_header_branch
      %12 = sbr.rel (%p10) target = $region8
    $region5: #{multi_t2_forward.1} parent=1 // loop_body
      %s14 = ssub.s32 %s9, 1
      %s15 = ssub.s32 %s9, 2
      %s22 = sadd.s32 1, %s17
      %p23 = scmp.ge.s32.totalorder %s22, 2
      %s24 = scalar_select %p23, 0, %s22
      %s25 = sadd.s32 1, %s16
      %s26 = scalar_select %p23, %s25, %s16
      %p27 = scmp.ge.s32.totalorder %s26, 2
      %s28 = scalar_select %p27, 0, %s26
      %s29 = ssub.s32 %s16, %s28
      %s30 = ssub.s32 %s17, %s24
      %s31 = sor.u32 %s29, %s30
      %p32 = scmp.eq.s32.totalorder %s31, 0
      %s34 = sadd.s32 %s33, 1
      %s35 = scalar_select %p32, %s33, %s34
      %p38 = pneg %p32
      %p39 = scmp.eq.s32.totalorder %s9, 3
      %p40 = por %p38, %p39
      %p41 = scmp.ne.s32.totalorder %s33, %s36
      %p42 = scmp.eq.s32.totalorder %s9, 0
      %p43 = por %p41, %p42
      %p44 = scmp.ne.s32.totalorder %s33, %s36
      %p45 = scmp.eq.s32.totalorder %s14, 3
      %p46 = por %p44, %p45
      %p47 = scmp.ne.s32.totalorder %s36, %s37
      %p48 = scmp.eq.s32.totalorder %s14, 0
      %p49 = por %p47, %p48
      %p50 = scmp.ne.s32.totalorder %s36, %s37
      %p51 = scmp.eq.s32.totalorder %s15, 3
      %p52 = por %p50, %p51
      %p54 = scmp.ne.s32.totalorder %s37, %s53
      %p55 = scmp.eq.s32.totalorder %s15, 0
      %p56 = por %p54, %p55
      %s58 = sadd.s32 %s57, 1
      %p61 = scmp.eq.s32.totalorder %s9, 3
      %p62 = scmp.ne.s32.totalorder %s57, %s59
      %p63 = scmp.eq.s32.totalorder %s9, 0
      %p64 = por %p62, %p63
      %p65 = scmp.ne.s32.totalorder %s57, %s59
      %p66 = scmp.eq.s32.totalorder %s14, 3
      %p67 = por %p65, %p66
      %p68 = scmp.ne.s32.totalorder %s59, %s60
      %p69 = scmp.eq.s32.totalorder %s14, 0
      %p70 = por %p68, %p69
      %p71 = scmp.ne.s32.totalorder %s59, %s60
      %p72 = scmp.eq.s32.totalorder %s15, 3
      %p73 = por %p71, %p72
      %p75 = scmp.ne.s32.totalorder %s60, %s74
      %p76 = scmp.eq.s32.totalorder %s15, 0
      %p77 = por %p75, %p76
      %s79 = sadd.s32 %s78, 1
      %p82 = scmp.eq.s32.totalorder %s9, 3
      %p83 = scmp.ne.s32.totalorder %s78, %s80
      %p84 = scmp.eq.s32.totalorder %s9, 0
      %p85 = por %p83, %p84
      %p86 = scmp.ne.s32.totalorder %s78, %s80
      %p87 = scmp.eq.s32.totalorder %s14, 3
      %p88 = por %p86, %p87
      %p89 = scmp.ne.s32.totalorder %s80, %s81
      %p90 = scmp.eq.s32.totalorder %s14, 0
      %p91 = por %p89, %p90
      %p92 = scmp.ne.s32.totalorder %s80, %s81
      %p93 = scmp.eq.s32.totalorder %s15, 3
      %p94 = por %p92, %p93
      %p96 = scmp.ne.s32.totalorder %s81, %s95
      %p97 = scmp.eq.s32.totalorder %s15, 0
      %p98 = por %p96, %p97
      %s99 = ssub.s32 %s16, %s28
      %s100 = ssub.s32 %s17, %s24
      %s101 = sor.u32 %s99, %s100
      %p102 = scmp.eq.s32.totalorder %s101, 0
      %s104 = sadd.s32 %s103, 1
      %s105 = scalar_select %p102, %s103, %s104
      %p108 = pneg %p102
      %p109 = scmp.eq.s32.totalorder %s9, 3
      %p110 = por %p108, %p109
      %p111 = scmp.ne.s32.totalorder %s103, %s106
      %p112 = scmp.eq.s32.totalorder %s9, 0
      %p113 = por %p111, %p112
      %p114 = scmp.ne.s32.totalorder %s103, %s106
      %p115 = scmp.eq.s32.totalorder %s14, 3
      %p116 = por %p114, %p115
      %p117 = scmp.ne.s32.totalorder %s106, %s107
      %p118 = scmp.eq.s32.totalorder %s14, 0
      %p119 = por %p117, %p118
      %p120 = scmp.ne.s32.totalorder %s106, %s107
      %p121 = scmp.eq.s32.totalorder %s15, 3
      %p122 = por %p120, %p121
      %p124 = scmp.ne.s32.totalorder %s107, %s123
      %p125 = scmp.eq.s32.totalorder %s15, 0
      %p126 = por %p124, %p125
      %p127 = scmp.le.s32.totalorder 1, %s9
      %p128 = scmp.lt.s32.totalorder %s9, 5
      %p129 = pnand %p127, %p128
      %p130 = pneg %p129
      // Predicated region
      $region9: #{multi_t2_forward.1} parent=5 // pred_check
        _
      $region10: #{multi_t2_forward.1} parent=5 // pred_check_branch
        %132 = sbr.rel (%p129) target = $region12
      $region11: #{multi_t2_forward.1} parent=5 // pred_region
        %s133 = ssub.s32 %s9, 1
        // Predicated region
        $region13: #{multi_t2_forward.1} parent=11 // pred_check
          %p134 = pneg %p70
        $region14: #{multi_t2_forward.1} parent=11 // pred_check_branch
          %136 = sbr.rel (%p134) target = $region16
        $region15: #{multi_t2_forward.1} parent=11 // pred_region
          _
        $region16: #{multi_t2_forward.1} parent=11 // pred_fallthru
          _
        // Predicated region
        $region17: #{multi_t2_forward.1} parent=11 // pred_check
          %p137 = pneg %p91
        $region18: #{multi_t2_forward.1} parent=11 // pred_check_branch
          %139 = sbr.rel (%p137) target = $region20
        $region19: #{multi_t2_forward.1} parent=11 // pred_region
          _
        $region20: #{multi_t2_forward.1} parent=11 // pred_fallthru
          _
      $region12: #{multi_t2_forward.1} parent=5 // pred_fallthru
        _
      %p140 = scmp.lt.s32.totalorder %s9, 4
      // Predicated region
      $region21: #{multi_t2_forward.1} parent=5 // pred_check
        %p141 = pneg %p140
      $region22: #{multi_t2_forward.1} parent=5 // pred_check_branch
        %143 = sbr.rel (%p141) target = $region24
      $region23: #{multi_t2_forward.1} parent=5 // pred_region
        // Predicated region
        $region25: #{multi_t2_forward.1} parent=23 // pred_check
          %p144 = pneg %p43
        $region26: #{multi_t2_forward.1} parent=23 // pred_check_branch
          %146 = sbr.rel (%p144) target = $region28
        $region27: #{multi_t2_forward.1} parent=23 // pred_region
          %s147 = sand.u32 %s33, 1
          %s148 = sand.u32 %s33, 1
          %s149 = smul.addr %s148, 16
          %s150 = scalar_lea.vmem [#allocation2], %s149
          %s151 = smul.addr %s16, 4
          %s152 = sadd.s32 %s17, %s151
          %s153 = smul.addr %s152, 8
          %s154 = scalar_lea.vmem %s0, %s153
          // Predicated region
          $region29: #{multi_t2_forward.1} parent=27 // pred_check
            _
          $region30: #{multi_t2_forward.1} parent=27 // pred_check_branch
            %156 = sbr.rel (0) target = $region32
          $region31: #{multi_t2_forward.1} parent=27 // pred_region
            // Predicated region
            $region33: #{multi_t2_forward.1} parent=31 // pred_check
              _
            $region34: #{multi_t2_forward.1} parent=31 // pred_check_branch
              %158 = sbr.rel (0) target = $region36
            $region35: #{multi_t2_forward.1} parent=31 // pred_region
              // Predicated region
              $region48: #{multi_t2_forward.1} parent=35 // pred_check
                _
              $region49: #{multi_t2_forward.1} parent=35 // pred_check_branch
                %175 = sbr.rel (0) target = $region51
              $region50: #{multi_t2_forward.1} parent=35 // pred_region
                loop: start=0, step=1, limit=1
                $region52: #{multi_t2_forward.1} parent=50 // loop_pre_header
                  _
                $region53: #{multi_t2_forward.1} parent=50 // loop_header
                  %s177 = sphi 0, %s181
                  %p178 = scmp.ge.s32.totalorder %s177, 1
                  %s182 = sphi %s154, %s154
                  %s183 = sphi %s150, %s150
                $region54: #{multi_t2_forward.1} parent=50 // loop_header_branch
                  %180 = sbr.rel (%p178) target = $region58
                $region55: #{multi_t2_forward.1} parent=50 // loop_body
                  %v184 = vld [vmem:[%s182] sm:$0xff]
                  %185 = vst [vmem:[%s183] sm:$0xff] %v184
                  %v186 = vld [vmem:[%s182 + $0x10] sm:$0xff]
                  %187 = vst [vmem:[%s183 + $0x8] sm:$0xff] %v186
                $region56: #{multi_t2_forward.1} parent=50 // loop_footer
                  %s181 = sadd.s32 1, %s177
                $region57: #{multi_t2_forward.1} parent=50 // loop_footer_branch
                  %176 = sbr.rel target = $region53
                $region58: #{multi_t2_forward.1} parent=50 // loop_exit
                  _
              $region51: #{multi_t2_forward.1} parent=35 // pred_fallthru
                _
              // Predicated region
              $region59: #{multi_t2_forward.1} parent=35 // pred_check
                _
              $region60: #{multi_t2_forward.1} parent=35 // pred_check_branch
                %189 = sbr.rel target = $region62
              $region61: #{multi_t2_forward.1} parent=35 // pred_region
                _
              $region62: #{multi_t2_forward.1} parent=35 // pred_fallthru
                _
            $region36: #{multi_t2_forward.1} parent=31 // pred_fallthru
              _
            // Predicated region
            $region37: #{multi_t2_forward.1} parent=31 // pred_check
              _
            $region38: #{multi_t2_forward.1} parent=31 // pred_check_branch
              %160 = sbr.rel target = $region40
            $region39: #{multi_t2_forward.1} parent=31 // pred_region
              loop: start=0, step=1, limit=1
              $region41: #{multi_t2_forward.1} parent=39 // loop_pre_header
                _
              $region42: #{multi_t2_forward.1} parent=39 // loop_header
                %s163 = sphi 0, %s167
                %p164 = scmp.ge.s32.totalorder %s163, 1
                %s168 = sphi %s154, %s154
                %s169 = sphi %s150, %s150
              $region43: #{multi_t2_forward.1} parent=39 // loop_header_branch
                %166 = sbr.rel (%p164) target = $region47
              $region44: #{multi_t2_forward.1} parent=39 // loop_body
                %v170 = vld [vmem:[%s168] sm:$0xff]
                %171 = vst [vmem:[%s169] sm:$0xff] %v170
                %v172 = vld [vmem:[%s168 + $0x10] sm:$0xff]
                %173 = vst [vmem:[%s169 + $0x8] sm:$0xff] %v172
              $region45: #{multi_t2_forward.1} parent=39 // loop_footer
                %s167 = sadd.s32 1, %s163
              $region46: #{multi_t2_forward.1} parent=39 // loop_footer_branch
                %162 = sbr.rel target = $region42
              $region47: #{multi_t2_forward.1} parent=39 // loop_exit
                _
            $region40: #{multi_t2_forward.1} parent=31 // pred_fallthru
              _
          $region32: #{multi_t2_forward.1} parent=27 // pred_fallthru
            _
          %190 = vnop
        $region28: #{multi_t2_forward.1} parent=23 // pred_fallthru
          _
      $region24: #{multi_t2_forward.1} parent=5 // pred_fallthru
        _
      %p191 = scmp.le.s32.totalorder 1, %s9
      %p192 = scmp.lt.s32.totalorder %s9, 5
      %p193 = pnand %p191, %p192
      %p194 = pneg %p193
      // Predicated region
      $region63: #{multi_t2_forward.1} parent=5 // pred_check
        _
      $region64: #{multi_t2_forward.1} parent=5 // pred_check_branch
        %196 = sbr.rel (%p193) target = $region66
      $region65: #{multi_t2_forward.1} parent=5 // pred_region
        %s197 = ssub.s32 %s9, 1
        %s198 = sand.u32 %s36, 1
        %s199 = sand.u32 %s36, 1
        %s200 = smul.addr %s199, 16
        %s201 = scalar_lea.vmem [#allocation2], %s200
        // Predicated region
        $region67: #{multi_t2_forward.1} parent=65 // pred_check
          %p202 = pneg %p49
        $region68: #{multi_t2_forward.1} parent=65 // pred_check_branch
          %204 = sbr.rel (%p202) target = $region70
        $region69: #{multi_t2_forward.1} parent=65 // pred_region
          _
        $region70: #{multi_t2_forward.1} parent=65 // pred_fallthru
          _
        %s205 = sand.u32 %s36, 1
        %s206 = sand.u32 %s36, 1
        %s207 = smul.addr %s206, 16
        %s208 = scalar_lea.vmem [#allocation2], %s207
        %p209 = pneg %p49
        %p210 = pneg %p46
        %p211 = pneg %p70
        %p212 = pneg %p67
        %p213 = pneg %p91
        %p214 = pneg %p88
        %p215 = pneg %p119
        %p216 = pneg %p116
        %s217 = sand.u32 %s106, 1
        %s218 = sand.u32 %s106, 1
        %s219 = smul.addr %s218, 64
        %s220 = scalar_lea.vmem [#allocation3], %s219
        %v221 = vld [vmem:[%s1] sm:$0xff]
        %v222 = vld [vmem:[%s1 + $0x8] sm:$0xff]
        %v223 = vld [vmem:[%s1 + $0x10] sm:$0xff]
        %v224 = vld [vmem:[%s1 + $0x18] sm:$0xff]
        %v225 = vld [vmem:[%s1 + $0x20] sm:$0xff]
        %v226 = vld [vmem:[%s1 + $0x28] sm:$0xff]
        %v227 = vld [vmem:[%s1 + $0x30] sm:$0xff]
        %v228 = vld [vmem:[%s1 + $0x38] sm:$0xff]
        %v229 = vld [vmem:[%s1 + $0x40] sm:$0xff]
        %v230 = vld [vmem:[%s1 + $0x48] sm:$0xff]
        %v231 = vld [vmem:[%s1 + $0x50] sm:$0xff]
        %v232 = vld [vmem:[%s1 + $0x58] sm:$0xff]
        %v233 = vld [vmem:[%s1 + $0x60] sm:$0xff]
        %v234 = vld [vmem:[%s1 + $0x68] sm:$0xff]
        %v235 = vld [vmem:[%s1 + $0x70] sm:$0xff]
        %v236 = vld [vmem:[%s1 + $0x78] sm:$0xff]
        %v237 = vld [vmem:[%s1 + $0x80] sm:$0xff]
        %v238 = vld [vmem:[%s1 + $0x88] sm:$0xff]
        %v239 = vld [vmem:[%s1 + $0x90] sm:$0xff]
        %v240 = vld [vmem:[%s1 + $0x98] sm:$0xff]
        %v241 = vld [vmem:[%s1 + $0xa0] sm:$0xff]
        %v242 = vld [vmem:[%s1 + $0xa8] sm:$0xff]
        %v243 = vld [vmem:[%s1 + $0xb0] sm:$0xff]
        %v244 = vld [vmem:[%s1 + $0xb8] sm:$0xff]
        %v245 = vld [vmem:[%s201] sm:$0xff]
        %v246 = vld [vmem:[%s201 + $0x8] sm:$0xff]
        %vm247 = vcmask 130048
        %v249 = vsel %vm247, %v221, 0
        %v252 = vsel %vm247, %v222, 0
        %v255 = vsel %vm247, %v223, 0
        %v258 = vsel %vm247, %v224, 0
        %v261 = vsel %vm247, %v225, 0
        %v264 = vsel %vm247, %v226, 0
        %v267 = vsel %vm247, %v227, 0
        %v270 = vsel %vm247, %v228, 0
        %v273 = vsel %vm247, %v229, 0
        %v276 = vsel %vm247, %v230, 0
        %v279 = vsel %vm247, %v231, 0
        %v282 = vsel %vm247, %v232, 0
        %v285 = vsel %vm247, %v233, 0
        %v288 = vsel %vm247, %v234, 0
        %v291 = vsel %vm247, %v235, 0
        %v294 = vsel %vm247, %v236, 0
        %v297 = vsel %vm247, %v237, 0
        %v300 = vsel %vm247, %v238, 0
        %v303 = vsel %vm247, %v239, 0
        %v306 = vsel %vm247, %v240, 0
        %v309 = vsel %vm247, %v241, 0
        %v312 = vsel %vm247, %v242, 0
        %v315 = vsel %vm247, %v243, 0
        %v318 = vsel %vm247, %v244, 0
        %320 = vmatprep.subr.mxu0 0.0
        %321 = vmatpush1.msra.mxu0 %v245
        %322 = vmatprep.subr.mxu0 0.0
        %323 = vmatpush1.msra.mxu0 %v246
        %324 = vmatprep.subr.mxu0 0.0
        %325 = vmatpush1.msra.mxu0 0.0
        %326 = vmatprep.subr.mxu0 0.0
        %327 = vmatpush1.msra.mxu0 0.0
        %328 = vmatprep.subr.mxu0 0.0
        %329 = vmatpush1.msra.mxu0 0.0
        %330 = vmatprep.subr.mxu0 0.0
        %331 = vmatpush1.msra.mxu0 0.0
        %332 = vmatprep.subr.mxu0 0.0
        %333 = vmatpush1.msra.mxu0 0.0
        %334 = vmatprep.subr.mxu0 0.0
        %335 = vmatpush1.msra.mxu0 0.0
        %336 = vmatprep.subr.mxu0 0.0
        %337 = vmatpush1.msra.mxu0 0.0
        %338 = vmatprep.subr.mxu0 0.0
        %339 = vmatpush1.msra.mxu0 0.0
        %340 = vmatprep.subr.mxu0 0.0
        %341 = vmatpush1.msra.mxu0 0.0
        %342 = vmatprep.subr.mxu0 0.0
        %343 = vmatpush1.msra.mxu0 0.0
        %344 = vmatprep.subr.mxu0 0.0
        %345 = vmatpush1.msra.mxu0 0.0
        %346 = vmatprep.subr.mxu0 0.0
        %347 = vmatpush1.msra.mxu0 0.0
        %348 = vmatprep.subr.mxu0 0.0
        %349 = vmatpush1.msra.mxu0 0.0
        %350 = vmatprep.subr.mxu0 0.0
        %351 = vmatpush1.msra.mxu0 0.0
        %352 = vmatprep.subr.mxu0 0.0
        %353 = vmatpush1.msra.mxu0 0.0
        %354 = vmatprep.subr.mxu0 0.0
        %355 = vmatpush1.msra.mxu0 0.0
        %356 = vmatprep.subr.mxu0 0.0
        %357 = vmatpush1.msra.mxu0 0.0
        %358 = vmatprep.subr.mxu0 0.0
        %359 = vmatpush1.msra.mxu0 0.0
        %360 = vmatprep.subr.mxu0 0.0
        %361 = vmatpush1.msra.mxu0 0.0
        %362 = vmatprep.subr.mxu0 0.0
        %363 = vmatpush1.msra.mxu0 0.0
        %364 = vmatprep.subr.mxu0 0.0
        %365 = vmatpush1.msra.mxu0 0.0
        %366 = vmatprep.subr.mxu0 0.0
        %367 = vmatpush1.msra.mxu0 0.0
        %368 = vmatprep.subr.mxu0 0.0
        %369 = vmatpush1.msra.mxu0 0.0
        %370 = vmatprep.subr.mxu0 0.0
        %371 = vmatpush1.msra.mxu0 0.0
        %372 = vmatprep.subr.mxu0 0.0
        %373 = vmatpush1.msra.mxu0 0.0
        %374 = vmatprep.subr.mxu0 0.0
        %375 = vmatpush1.msra.mxu0 0.0
        %376 = vmatprep.subr.mxu0 0.0
        %377 = vmatpush1.msra.mxu0 0.0
        %378 = vmatprep.subr.mxu0 0.0
        %379 = vmatpush1.msra.mxu0 0.0
        %380 = vmatprep.subr.mxu0 0.0
        %381 = vmatpush1.msra.mxu0 0.0
        %382 = vmatprep.subr.mxu0 0.0
        %383 = vmatpush1.msra.mxu0 0.0
        %384 = vmatprep.mubr.f32.mxu0 0.0
        %385 = vmatmul.mubr.f32.gmra.mrb[0].mxu0 %v249
        %v386 = vpop.f32.mrb[0].mxu0
        %v387 = vadd.f32 0.0, %v386
        %v388 = vpop.f32.mrb[0].mxu0
        %389 = vmatprep.mubr.f32.mxu0 0.0
        %390 = vmatmul.mubr.f32.gmra.mrb[0].mxu0 %v252
        %v391 = vpop.f32.mrb[0].mxu0
        %v392 = vadd.f32 0.0, %v391
        %v393 = vpop.f32.mrb[0].mxu0
        %394 = vmatprep.mubr.f32.mxu0 0.0
        %395 = vmatmul.mubr.f32.gmra.mrb[0].mxu0 %v255
        %v396 = vpop.f32.mrb[0].mxu0
        %v397 = vadd.f32 0.0, %v396
        %v398 = vpop.f32.mrb[0].mxu0
        %399 = vmatprep.mubr.f32.mxu0 0.0
        %400 = vmatmul.mubr.f32.gmra.mrb[0].mxu0 %v258
        %v401 = vpop.f32.mrb[0].mxu0
        %v402 = vadd.f32 0.0, %v401
        %v403 = vpop.f32.mrb[0].mxu0
        %404 = vmatprep.mubr.f32.mxu0 0.0
        %405 = vmatmul.mubr.f32.gmra.mrb[0].mxu0 %v261
        %v406 = vpop.f32.mrb[0].mxu0
        %v407 = vadd.f32 0.0, %v406
        %v408 = vpop.f32.mrb[0].mxu0
        %409 = vmatprep.mubr.f32.mxu0 0.0
        %410 = vmatmul.mubr.f32.gmra.mrb[0].mxu0 %v264
        %v411 = vpop.f32.mrb[0].mxu0
        %v412 = vadd.f32 0.0, %v411
        %v413 = vpop.f32.mrb[0].mxu0
        %414 = vmatprep.mubr.f32.mxu0 0.0
        %415 = vmatmul.mubr.f32.gmra.mrb[0].mxu0 %v267
        %v416 = vpop.f32.mrb[0].mxu0
        %v417 = vadd.f32 0.0, %v416
        %v418 = vpop.f32.mrb[0].mxu0
        %419 = vmatprep.mubr.f32.mxu0 0.0
        %420 = vmatmul.mubr.f32.gmra.mrb[0].mxu0 %v270
        %v421 = vpop.f32.mrb[0].mxu0
        %v422 = vadd.f32 0.0, %v421
        %v423 = vpop.f32.mrb[0].mxu0
        %424 = vmatprep.mubr.f32.mxu0 0.0
        %425 = vmatmul.mubr.f32.gmra.mrb[0].mxu0 %v273
        %v426 = vpop.f32.mrb[0].mxu0
        %v427 = vadd.f32 0.0, %v426
        %v428 = vpop.f32.mrb[0].mxu0
        %429 = vmatprep.mubr.f32.mxu0 0.0
        %430 = vmatmul.mubr.f32.gmra.mrb[0].mxu0 %v276
        %v431 = vpop.f32.mrb[0].mxu0
        %v432 = vadd.f32 0.0, %v431
        %v433 = vpop.f32.mrb[0].mxu0
        %434 = vmatprep.mubr.f32.mxu0 0.0
        %435 = vmatmul.mubr.f32.gmra.mrb[0].mxu0 %v279
        %v436 = vpop.f32.mrb[0].mxu0
        %v437 = vadd.f32 0.0, %v436
        %v438 = vpop.f32.mrb[0].mxu0
        %439 = vmatprep.mubr.f32.mxu0 0.0
        %440 = vmatmul.mubr.f32.gmra.mrb[0].mxu0 %v282
        %v441 = vpop.f32.mrb[0].mxu0
        %v442 = vadd.f32 0.0, %v441
        %v443 = vpop.f32.mrb[0].mxu0
        %444 = vmatprep.mubr.f32.mxu0 0.0
        %445 = vmatmul.mubr.f32.gmra.mrb[0].mxu0 %v285
        %v446 = vpop.f32.mrb[0].mxu0
        %v447 = vadd.f32 0.0, %v446
        %v448 = vpop.f32.mrb[0].mxu0
        %449 = vmatprep.mubr.f32.mxu0 0.0
        %450 = vmatmul.mubr.f32.gmra.mrb[0].mxu0 %v288
        %v451 = vpop.f32.mrb[0].mxu0
        %v452 = vadd.f32 0.0, %v451
        %v453 = vpop.f32.mrb[0].mxu0
        %454 = vmatprep.mubr.f32.mxu0 0.0
        %455 = vmatmul.mubr.f32.gmra.mrb[0].mxu0 %v291
        %v456 = vpop.f32.mrb[0].mxu0
        %v457 = vadd.f32 0.0, %v456
        %v458 = vpop.f32.mrb[0].mxu0
        %459 = vmatprep.mubr.f32.mxu0 0.0
        %460 = vmatmul.mubr.f32.gmra.mrb[0].mxu0 %v294
        %v461 = vpop.f32.mrb[0].mxu0
        %v462 = vadd.f32 0.0, %v461
        %v463 = vpop.f32.mrb[0].mxu0
        %464 = vmatprep.mubr.f32.mxu0 0.0
        %465 = vmatmul.mubr.f32.gmra.mrb[0].mxu0 %v297
        %v466 = vpop.f32.mrb[0].mxu0
        %v467 = vadd.f32 0.0, %v466
        %v468 = vpop.f32.mrb[0].mxu0
        %469 = vmatprep.mubr.f32.mxu0 0.0
        %470 = vmatmul.mubr.f32.gmra.mrb[0].mxu0 %v300
        %v471 = vpop.f32.mrb[0].mxu0
        %v472 = vadd.f32 0.0, %v471
        %v473 = vpop.f32.mrb[0].mxu0
        %474 = vmatprep.mubr.f32.mxu0 0.0
        %475 = vmatmul.mubr.f32.gmra.mrb[0].mxu0 %v303
        %v476 = vpop.f32.mrb[0].mxu0
        %v477 = vadd.f32 0.0, %v476
        %v478 = vpop.f32.mrb[0].mxu0
        %479 = vmatprep.mubr.f32.mxu0 0.0
        %480 = vmatmul.mubr.f32.gmra.mrb[0].mxu0 %v306
        %v481 = vpop.f32.mrb[0].mxu0
        %v482 = vadd.f32 0.0, %v481
        %v483 = vpop.f32.mrb[0].mxu0
        %484 = vmatprep.mubr.f32.mxu0 0.0
        %485 = vmatmul.mubr.f32.gmra.mrb[0].mxu0 %v309
        %v486 = vpop.f32.mrb[0].mxu0
        %v487 = vadd.f32 0.0, %v486
        %v488 = vpop.f32.mrb[0].mxu0
        %489 = vmatprep.mubr.f32.mxu0 0.0
        %490 = vmatmul.mubr.f32.gmra.mrb[0].mxu0 %v312
        %v491 = vpop.f32.mrb[0].mxu0
        %v492 = vadd.f32 0.0, %v491
        %v493 = vpop.f32.mrb[0].mxu0
        %494 = vmatprep.mubr.f32.mxu0 0.0
        %495 = vmatmul.mubr.f32.gmra.mrb[0].mxu0 %v315
        %v496 = vpop.f32.mrb[0].mxu0
        %v497 = vadd.f32 0.0, %v496
        %v498 = vpop.f32.mrb[0].mxu0
        %499 = vmatprep.mubr.f32.mxu0 0.0
        %500 = vmatmul.mubr.f32.gmra.mrb[0].mxu0 %v318
        %v501 = vpop.f32.mrb[0].mxu0
        %v502 = vadd.f32 0.0, %v501
        %v503 = vpop.f32.mrb[0].mxu0
        %504 = vdwg.mxu0
        %v505 = vmul.f32 %v387, 0.2
        %v506 = vmul.f32 %v392, 0.2
        %v507 = vmul.f32 %v397, 0.2
        %v508 = vmul.f32 %v402, 0.2
        %v509 = vmul.f32 %v407, 0.2
        %v510 = vmul.f32 %v412, 0.2
        %v511 = vmul.f32 %v417, 0.2
        %v512 = vmul.f32 %v422, 0.2
        %v513 = vmul.f32 %v427, 0.2
        %v514 = vmul.f32 %v432, 0.2
        %v515 = vmul.f32 %v437, 0.2
        %v516 = vmul.f32 %v442, 0.2
        %v517 = vmul.f32 %v447, 0.2
        %v518 = vmul.f32 %v452, 0.2
        %v519 = vmul.f32 %v457, 0.2
        %v520 = vmul.f32 %v462, 0.2
        %v521 = vmul.f32 %v467, 0.2
        %v522 = vmul.f32 %v472, 0.2
        %v523 = vmul.f32 %v477, 0.2
        %v524 = vmul.f32 %v482, 0.2
        %v525 = vmul.f32 %v487, 0.2
        %v526 = vmul.f32 %v492, 0.2
        %v527 = vmul.f32 %v497, 0.2
        %v528 = vmul.f32 %v502, 0.2
        %v529 = vmax.f32 %v387, %v505
        %v530 = vmax.f32 %v392, %v506
        %v531 = vmax.f32 %v397, %v507
        %v532 = vmax.f32 %v402, %v508
        %v533 = vmax.f32 %v407, %v509
        %v534 = vmax.f32 %v412, %v510
        %v535 = vmax.f32 %v417, %v511
        %v536 = vmax.f32 %v422, %v512
        %v537 = vmax.f32 %v427, %v513
        %v538 = vmax.f32 %v432, %v514
        %v539 = vmax.f32 %v437, %v515
        %v540 = vmax.f32 %v442, %v516
        %v541 = vmax.f32 %v447, %v517
        %v542 = vmax.f32 %v452, %v518
        %v543 = vmax.f32 %v457, %v519
        %v544 = vmax.f32 %v462, %v520
        %v545 = vmax.f32 %v467, %v521
        %v546 = vmax.f32 %v472, %v522
        %v547 = vmax.f32 %v477, %v523
        %v548 = vmax.f32 %v482, %v524
        %v549 = vmax.f32 %v487, %v525
        %v550 = vmax.f32 %v492, %v526
        %v551 = vmax.f32 %v497, %v527
        %v552 = vmax.f32 %v502, %v528
        %v553 = vld [vmem:[%s2] sm:$0xff]
        %v554 = vld [vmem:[%s2 + $0x8] sm:$0xff]
        %v555 = vld [vmem:[%s2 + $0x10] sm:$0xff]
        %v556 = vld [vmem:[%s2 + $0x18] sm:$0xff]
        %v557 = vld [vmem:[%s2 + $0x20] sm:$0xff]
        %v558 = vld [vmem:[%s2 + $0x28] sm:$0xff]
        %v559 = vld [vmem:[%s2 + $0x30] sm:$0xff]
        %v560 = vld [vmem:[%s2 + $0x38] sm:$0xff]
        %v561 = vld [vmem:[%s2 + $0x40] sm:$0xff]
        %v562 = vld [vmem:[%s2 + $0x48] sm:$0xff]
        %v563 = vld [vmem:[%s2 + $0x50] sm:$0xff]
        %v564 = vld [vmem:[%s2 + $0x58] sm:$0xff]
        %v565 = vld [vmem:[%s2 + $0x60] sm:$0xff]
        %v566 = vld [vmem:[%s2 + $0x68] sm:$0xff]
        %v567 = vld [vmem:[%s2 + $0x70] sm:$0xff]
        %v568 = vld [vmem:[%s2 + $0x78] sm:$0xff]
        %vm569 = vcmask 523264
        %v571 = vsel %vm569, %v554, 0
        %v574 = vsel %vm569, %v556, 0
        %v577 = vsel %vm569, %v558, 0
        %v580 = vsel %vm569, %v560, 0
        %v583 = vsel %vm569, %v562, 0
        %v586 = vsel %vm569, %v564, 0
        %v589 = vsel %vm569, %v566, 0
        %v592 = vsel %vm569, %v568, 0
        %594 = vmatprep.subr.mxu0 0.0
        %595 = vmatpush1.msra.mxu0 %v529
        %596 = vmatprep.subr.mxu0 0.0
        %597 = vmatpush1.msra.mxu0 %v530
        %598 = vmatprep.subr.mxu0 0.0
        %599 = vmatpush1.msra.mxu0 %v531
        %600 = vmatprep.subr.mxu0 0.0
        %601 = vmatpush1.msra.mxu0 %v532
        %602 = vmatprep.subr.mxu0 0.0
        %603 = vmatpush1.msra.mxu0 %v533
        %604 = vmatprep.subr.mxu0 0.0
        %605 = vmatpush1.msra.mxu0 %v534
        %606 = vmatprep.subr.mxu0 0.0
        %607 = vmatpush1.msra.mxu0 %v535
        %608 = vmatprep.subr.mxu0 0.0
        %609 = vmatpush1.msra.mxu0 %v536
        %610 = vmatprep.subr.mxu0 0.0
        %611 = vmatpush1.msra.mxu0 %v537
        %612 = vmatprep.subr.mxu0 0.0
        %613 = vmatpush1.msra.mxu0 %v538
        %614 = vmatprep.subr.mxu0 0.0
        %615 = vmatpush1.msra.mxu0 %v539
        %616 = vmatprep.subr.mxu0 0.0
        %617 = vmatpush1.msra.mxu0 %v540
        %618 = vmatprep.subr.mxu0 0.0
        %619 = vmatpush1.msra.mxu0 %v541
        %620 = vmatprep.subr.mxu0 0.0
        %621 = vmatpush1.msra.mxu0 %v542
        %622 = vmatprep.subr.mxu0 0.0
        %623 = vmatpush1.msra.mxu0 %v543
        %624 = vmatprep.subr.mxu0 0.0
        %625 = vmatpush1.msra.mxu0 %v544
        %626 = vmatprep.subr.mxu0 0.0
        %627 = vmatpush1.msra.mxu0 %v545
        %628 = vmatprep.subr.mxu0 0.0
        %629 = vmatpush1.msra.mxu0 %v546
        %630 = vmatprep.subr.mxu0 0.0
        %631 = vmatpush1.msra.mxu0 %v547
        %632 = vmatprep.subr.mxu0 0.0
        %633 = vmatpush1.msra.mxu0 %v548
        %634 = vmatprep.subr.mxu0 0.0
        %635 = vmatpush1.msra.mxu0 %v549
        %636 = vmatprep.subr.mxu0 0.0
        %637 = vmatpush1.msra.mxu0 %v550
        %638 = vmatprep.subr.mxu0 0.0
        %639 = vmatpush1.msra.mxu0 %v551
        %640 = vmatprep.subr.mxu0 0.0
        %641 = vmatpush1.msra.mxu0 %v552
        %642 = vmatprep.subr.mxu0 0.0
        %643 = vmatpush1.msra.mxu0 0.0
        %644 = vmatprep.subr.mxu0 0.0
        %645 = vmatpush1.msra.mxu0 0.0
        %646 = vmatprep.subr.mxu0 0.0
        %647 = vmatpush1.msra.mxu0 0.0
        %648 = vmatprep.subr.mxu0 0.0
        %649 = vmatpush1.msra.mxu0 0.0
        %650 = vmatprep.subr.mxu0 0.0
        %651 = vmatpush1.msra.mxu0 0.0
        %652 = vmatprep.subr.mxu0 0.0
        %653 = vmatpush1.msra.mxu0 0.0
        %654 = vmatprep.subr.mxu0 0.0
        %655 = vmatpush1.msra.mxu0 0.0
        %656 = vmatprep.subr.mxu0 0.0
        %657 = vmatpush1.msra.mxu0 0.0
        %658 = vmatprep.mubr.f32.mxu0 %v571
        %659 = vmatmul.mubr.f32.gmra.mrb[0].mxu0 %v553
        %v660 = vpop.f32.mrb[0].mxu0
        %v661 = vadd.f32 0.0, %v660
        %v662 = vpop.f32.mrb[0].mxu0
        %663 = vmatprep.mubr.f32.mxu0 %v574
        %664 = vmatmul.mubr.f32.gmra.mrb[0].mxu0 %v555
        %v665 = vpop.f32.mrb[0].mxu0
        %v666 = vadd.f32 0.0, %v665
        %v667 = vpop.f32.mrb[0].mxu0
        %668 = vmatprep.mubr.f32.mxu0 %v577
        %669 = vmatmul.mubr.f32.gmra.mrb[0].mxu0 %v557
        %v670 = vpop.f32.mrb[0].mxu0
        %v671 = vadd.f32 0.0, %v670
        %v672 = vpop.f32.mrb[0].mxu0
        %673 = vmatprep.mubr.f32.mxu0 %v580
        %674 = vmatmul.mubr.f32.gmra.mrb[0].mxu0 %v559
        %v675 = vpop.f32.mrb[0].mxu0
        %v676 = vadd.f32 0.0, %v675
        %v677 = vpop.f32.mrb[0].mxu0
        %678 = vmatprep.mubr.f32.mxu0 %v583
        %679 = vmatmul.mubr.f32.gmra.mrb[0].mxu0 %v561
        %v680 = vpop.f32.mrb[0].mxu0
        %v681 = vadd.f32 0.0, %v680
        %v682 = vpop.f32.mrb[0].mxu0
        %683 = vmatprep.mubr.f32.mxu0 %v586
        %684 = vmatmul.mubr.f32.gmra.mrb[0].mxu0 %v563
        %v685 = vpop.f32.mrb[0].mxu0
        %v686 = vadd.f32 0.0, %v685
        %v687 = vpop.f32.mrb[0].mxu0
        %688 = vmatprep.mubr.f32.mxu0 %v589
        %689 = vmatmul.mubr.f32.gmra.mrb[0].mxu0 %v565
        %v690 = vpop.f32.mrb[0].mxu0
        %v691 = vadd.f32 0.0, %v690
        %v692 = vpop.f32.mrb[0].mxu0
        %693 = vmatprep.mubr.f32.mxu0 %v592
        %694 = vmatmul.mubr.f32.gmra.mrb[0].mxu0 %v567
        %v695 = vpop.f32.mrb[0].mxu0
        %v696 = vadd.f32 0.0, %v695
        %v697 = vpop.f32.mrb[0].mxu0
        %698 = vdwg.mxu0
        %699 = vst [vmem:[%s220] sm:$0xff] %v661
        %700 = vst [vmem:[%s220 + $0x8] sm:$0xff] %v666
        %701 = vst [vmem:[%s220 + $0x10] sm:$0xff] %v671
        %702 = vst [vmem:[%s220 + $0x18] sm:$0xff] %v676
        %703 = vst [vmem:[%s220 + $0x20] sm:$0xff] %v681
        %704 = vst [vmem:[%s220 + $0x28] sm:$0xff] %v686
        %705 = vst [vmem:[%s220 + $0x30] sm:$0xff] %v691
        %706 = vst [vmem:[%s220 + $0x38] sm:$0xff] %v696
        %s707 = sand.u32 %s106, 1
        %s708 = sand.u32 %s106, 1
        %s709 = smul.addr %s708, 64
        %s710 = scalar_lea.vmem [#allocation3], %s709
        // Predicated region
        $region71: #{multi_t2_forward.1} parent=65 // pred_check
          %p711 = pneg %p116
        $region72: #{multi_t2_forward.1} parent=65 // pred_check_branch
          %713 = sbr.rel (%p711) target = $region74
        $region73: #{multi_t2_forward.1} parent=65 // pred_region
          %s714 = smul.addr %s18, 16
          %s715 = sadd.s32 %s19, %s714
          %s716 = smul.addr %s715, 8
          %s717 = scalar_lea.vmem %s3, %s716
          // Predicated region
          $region75: #{multi_t2_forward.1} parent=73 // pred_check
            _
          $region76: #{multi_t2_forward.1} parent=73 // pred_check_branch
            %719 = sbr.rel (0) target = $region78
          $region77: #{multi_t2_forward.1} parent=73 // pred_region
            // Predicated region
            $region79: #{multi_t2_forward.1} parent=77 // pred_check
              _
            $region80: #{multi_t2_forward.1} parent=77 // pred_check_branch
              %721 = sbr.rel (0) target = $region82
            $region81: #{multi_t2_forward.1} parent=77 // pred_region
              // Predicated region
              $region94: #{multi_t2_forward.1} parent=81 // pred_check
                _
              $region95: #{multi_t2_forward.1} parent=81 // pred_check_branch
                %750 = sbr.rel (0) target = $region97
              $region96: #{multi_t2_forward.1} parent=81 // pred_region
                loop: start=0, step=1, limit=1
                $region98: #{multi_t2_forward.1} parent=96 // loop_pre_header
                  _
                $region99: #{multi_t2_forward.1} parent=96 // loop_header
                  %s752 = sphi 0, %s756
                  %p753 = scmp.ge.s32.totalorder %s752, 1
                  %s757 = sphi %s710, %s710
                  %s758 = sphi %s717, %s717
                $region100: #{multi_t2_forward.1} parent=96 // loop_header_branch
                  %755 = sbr.rel (%p753) target = $region104
                $region101: #{multi_t2_forward.1} parent=96 // loop_body
                  %v759 = vld [vmem:[%s757] sm:$0xff]
                  %760 = vst [vmem:[%s758] sm:$0xff] %v759
                  %v761 = vld [vmem:[%s757 + $0x8] sm:$0xff]
                  %762 = vst [vmem:[%s758 + $0x10] sm:$0xff] %v761
                  %v763 = vld [vmem:[%s757 + $0x10] sm:$0xff]
                  %764 = vst [vmem:[%s758 + $0x20] sm:$0xff] %v763
                  %v765 = vld [vmem:[%s757 + $0x18] sm:$0xff]
                  %766 = vst [vmem:[%s758 + $0x30] sm:$0xff] %v765
                  %v767 = vld [vmem:[%s757 + $0x20] sm:$0xff]
                  %768 = vst [vmem:[%s758 + $0x40] sm:$0xff] %v767
                  %v769 = vld [vmem:[%s757 + $0x28] sm:$0xff]
                  %770 = vst [vmem:[%s758 + $0x50] sm:$0xff] %v769
                  %v771 = vld [vmem:[%s757 + $0x30] sm:$0xff]
                  %772 = vst [vmem:[%s758 + $0x60] sm:$0xff] %v771
                  %v773 = vld [vmem:[%s757 + $0x38] sm:$0xff]
                  %774 = vst [vmem:[%s758 + $0x70] sm:$0xff] %v773
                $region102: #{multi_t2_forward.1} parent=96 // loop_footer
                  %s756 = sadd.s32 1, %s752
                $region103: #{multi_t2_forward.1} parent=96 // loop_footer_branch
                  %751 = sbr.rel target = $region99
                $region104: #{multi_t2_forward.1} parent=96 // loop_exit
                  _
              $region97: #{multi_t2_forward.1} parent=81 // pred_fallthru
                _
              // Predicated region
              $region105: #{multi_t2_forward.1} parent=81 // pred_check
                _
              $region106: #{multi_t2_forward.1} parent=81 // pred_check_branch
                %776 = sbr.rel target = $region108
              $region107: #{multi_t2_forward.1} parent=81 // pred_region
                _
              $region108: #{multi_t2_forward.1} parent=81 // pred_fallthru
                _
            $region82: #{multi_t2_forward.1} parent=77 // pred_fallthru
              _
            // Predicated region
            $region83: #{multi_t2_forward.1} parent=77 // pred_check
              _
            $region84: #{multi_t2_forward.1} parent=77 // pred_check_branch
              %723 = sbr.rel target = $region86
            $region85: #{multi_t2_forward.1} parent=77 // pred_region
              loop: start=0, step=1, limit=1
              $region87: #{multi_t2_forward.1} parent=85 // loop_pre_header
                _
              $region88: #{multi_t2_forward.1} parent=85 // loop_header
                %s726 = sphi 0, %s730
                %p727 = scmp.ge.s32.totalorder %s726, 1
                %s731 = sphi %s710, %s710
                %s732 = sphi %s717, %s717
              $region89: #{multi_t2_forward.1} parent=85 // loop_header_branch
                %729 = sbr.rel (%p727) target = $region93
              $region90: #{multi_t2_forward.1} parent=85 // loop_body
                %v733 = vld [vmem:[%s731] sm:$0xff]
                %734 = vst [vmem:[%s732] sm:$0xff] %v733
                %v735 = vld [vmem:[%s731 + $0x8] sm:$0xff]
                %736 = vst [vmem:[%s732 + $0x10] sm:$0xff] %v735
                %v737 = vld [vmem:[%s731 + $0x10] sm:$0xff]
                %738 = vst [vmem:[%s732 + $0x20] sm:$0xff] %v737
                %v739 = vld [vmem:[%s731 + $0x18] sm:$0xff]
                %740 = vst [vmem:[%s732 + $0x30] sm:$0xff] %v739
                %v741 = vld [vmem:[%s731 + $0x20] sm:$0xff]
                %742 = vst [vmem:[%s732 + $0x40] sm:$0xff] %v741
                %v743 = vld [vmem:[%s731 + $0x28] sm:$0xff]
                %744 = vst [vmem:[%s732 + $0x50] sm:$0xff] %v743
                %v745 = vld [vmem:[%s731 + $0x30] sm:$0xff]
                %746 = vst [vmem:[%s732 + $0x60] sm:$0xff] %v745
                %v747 = vld [vmem:[%s731 + $0x38] sm:$0xff]
                %748 = vst [vmem:[%s732 + $0x70] sm:$0xff] %v747
              $region91: #{multi_t2_forward.1} parent=85 // loop_footer
                %s730 = sadd.s32 1, %s726
              $region92: #{multi_t2_forward.1} parent=85 // loop_footer_branch
                %725 = sbr.rel target = $region88
              $region93: #{multi_t2_forward.1} parent=85 // loop_exit
                _
            $region86: #{multi_t2_forward.1} parent=77 // pred_fallthru
              _
          $region78: #{multi_t2_forward.1} parent=73 // pred_fallthru
            _
          %777 = vnop
        $region74: #{multi_t2_forward.1} parent=65 // pred_fallthru
          _
      $region66: #{multi_t2_forward.1} parent=5 // pred_fallthru
        _
      %p778 = scmp.le.s32.totalorder 2, %s9
      // Predicated region
      $region109: #{multi_t2_forward.1} parent=5 // pred_check
        %p779 = pneg %p778
      $region110: #{multi_t2_forward.1} parent=5 // pred_check_branch
        %781 = sbr.rel (%p779) target = $region112
      $region111: #{multi_t2_forward.1} parent=5 // pred_region
        %s782 = ssub.s32 %s9, 2
        // Predicated region
        $region113: #{multi_t2_forward.1} parent=111 // pred_check
          %p783 = pneg %p122
        $region114: #{multi_t2_forward.1} parent=111 // pred_check_branch
          %785 = sbr.rel (%p783) target = $region116
        $region115: #{multi_t2_forward.1} parent=111 // pred_region
          %s786 = sand.u32 %s107, 1
          %s787 = sand.u32 %s107, 1
          %s788 = smul.addr %s787, 64
          %s789 = scalar_lea.vmem [#allocation3], %s788
        $region116: #{multi_t2_forward.1} parent=111 // pred_fallthru
          _
      $region112: #{multi_t2_forward.1} parent=5 // pred_fallthru
        _
    $region6: #{multi_t2_forward.1} parent=1 // loop_footer
      %s13 = sadd.s32 1, %s9
    $region7: #{multi_t2_forward.1} parent=1 // loop_footer_branch
      %8 = sbr.rel target = $region3
    $region8: #{multi_t2_forward.1} parent=1 // loop_exit
      _

</llo_original>
